<compile_context>
chip_gen: v7x
topology: tpu7x:2x2x1
jax: 0.10.0
libtpu: 0.0.40
codegen_flags: <defaults>
</compile_context>

<pallas_src>
import functools
import math

import jax
import jax.numpy as jnp
from jax.experimental import pallas as pl
from jax.experimental.pallas import tpu as pltpu


def make_pe_table(d_model: int, max_len: int = 100) -> jnp.ndarray:
    """Sinusoidal positional table, shape (max_len, d_model), float32."""
    position = jnp.arange(max_len, dtype=jnp.float32)[:, None]                 # (L, 1)
    div_term = jnp.exp(jnp.arange(0, d_model, 2, dtype=jnp.float32)
                       * (-math.log(10000.0) / d_model))                        # (D/2,)
    pe = jnp.zeros((max_len, d_model), dtype=jnp.float32)
    pe = pe.at[:, 0::2].set(jnp.sin(position * div_term))
    pe = pe.at[:, 1::2].set(jnp.cos(position * div_term))
    return pe


def _pe_kernel(seed_ref, x_ref, pe_ref, o_ref, *, p: float, train: bool,
               use_hw_prng: bool):
    """x_ref/o_ref: (TR, C) tile (batch dim squeezed); pe_ref: (TR, C) tile."""
    y = x_ref[...] + pe_ref[...]                     # compute in the input dtype

    if train and p > 0.0:
        t = pl.program_id(0)                         # row-tile index
        b = pl.program_id(1)                         # batch index
        if use_hw_prng:
            # Hardware PRNG: one draw + one compare/select per element keeps the
            # train path HBM-bound instead of VALU-bound (matters on v7x).
            pltpu.prng_seed(seed_ref[0], t, b)
            bits = pltpu.bitcast(pltpu.prng_random_bits(y.shape), jnp.uint32)
        else:
            # Portable splitmix-style counter hash (pure VPU u32 ops) for
            # interpret / CPU runs; unique counter per (batch, element).
            n_b = pl.num_programs(1)
            tr, c = y.shape
            rows = jax.lax.broadcasted_iota(jnp.uint32, (tr, c), 0)
            cols = jax.lax.broadcasted_iota(jnp.uint32, (tr, c), 1)
            tile = (t * n_b + b).astype(jnp.uint32)
            idx = tile * jnp.uint32(tr * c) + rows * jnp.uint32(c) + cols
            h = idx ^ (seed_ref[0].astype(jnp.uint32) * jnp.uint32(0x9E3779B9))
            h = h ^ (h >> 16)
            h = h * jnp.uint32(0x7FEB352D)
            h = h ^ (h >> 15)
            h = h * jnp.uint32(0x846CA68B)
            h = h ^ (h >> 16)
            bits = h

        # Single u32 threshold compare + one select; inverted-dropout scale folded in.
        thr = jnp.uint32(min(int(round(p * 2.0 ** 32)), 2 ** 32 - 1))
        inv_keep = jnp.asarray(1.0 / (1.0 - p), dtype=y.dtype)
        y = jnp.where(bits >= thr, y * inv_keep, jnp.zeros_like(y))

    o_ref[...] = y.astype(o_ref.dtype)


def _lane_dense_cols(length: int, max_cols: int = 2048) -> int:
    """Largest multiple of 128 (<= max_cols) dividing `length`, else 0."""
    c = (max_cols // 128) * 128
    while c >= 128:
        if length % c == 0:
            return c
        c -= 128
    return 0


def _choose_row_tile(R: int, C: int, itemsize: int, batch: int,
                     *, target_bytes: int = 2 << 20,
                     min_grid_steps: int = 8) -> int:
    """~2 MiB blocks, sublane aligned; shrink so >= min_grid_steps grid steps
    exist (v7x has 2 TensorCores; on 1-TC chips the shrink is harmless)."""
    sub = 8 if itemsize >= 4 else 16
    rows = (target_bytes // max(1, C * itemsize)) // sub * sub
    rows = max(sub, rows)
    rows = min(rows, R)                  # full extent is always a legal block
    while rows > sub and -(-R // rows) * batch < min_grid_steps:
        new_rows = max(sub, ((rows // 2) // sub) * sub)
        if new_rows == rows:
            break
        rows = new_rows
    return rows


def positional_encoding(x: jnp.ndarray,
                        pe_table: jnp.ndarray,
                        *,
                        p: float = 0.1,
                        train: bool = False,
                        seed=0,
                        use_hw_prng=None,
                        alias_x_to_out: bool = False) -> jnp.ndarray:
    """out = dropout(x + pe_table[:S], p);  x: (B, S, D)."""
    B, S, D = x.shape
    max_len, d_pe = pe_table.shape
    assert d_pe == D, "pe table feature dim must match x"
    assert S <= max_len, "sequence longer than positional table"
    p = float(p)
    assert 0.0 <= p <= 1.0, "dropout probability must be in [0, 1]"
    train = bool(train)

    if train and p >= 1.0:               # torch Dropout(p=1) zeroes everything
        return jnp.zeros_like(x)
    if use_hw_prng is None:               # hardware PRNG on real TPUs,
        use_hw_prng = jax.default_backend() == "tpu"   # portable hash elsewhere

    pe = pe_table[:S].astype(x.dtype)     # (S, D); compute dtype == x dtype

    # Lane-dense 2-D view (R, C) of each batch row's S*D-element stream.
    if D % 128 == 0:
        R, C = S, D
    else:
        c = _lane_dense_cols(S * D)
        if c:
            R, C = (S * D) // c, c
        else:
            R, C = S, D                   # cannot densify without padding
    x3 = x.reshape(B, R, C)
    pe2 = pe.reshape(R, C)

    itemsize = jnp.dtype(x.dtype).itemsize
    TR = _choose_row_tile(R, C, itemsize, B)
    n_r = pl.cdiv(R, TR)

    seed_arr = jnp.atleast_1d(jnp.asarray(seed, dtype=jnp.int32))
    kernel = functools.partial(_pe_kernel, p=p, train=train,
                               use_hw_prng=bool(use_hw_prng))

    n_el = B * S * D
    cost = pl.CostEstimate(
        flops=n_el * (4 if (train and p > 0.0) else 1),
        transcendentals=0,
        bytes_accessed=2 * n_el * itemsize + S * D * itemsize,
    )
    extra = {"input_output_aliases": {1: 0}} if alias_x_to_out else {}

    out3 = pl.pallas_call(
        kernel,
        out_shape=jax.ShapeDtypeStruct((B, R, C), x.dtype),
        grid_spec=pltpu.PrefetchScalarGridSpec(
            num_scalar_prefetch=1,                        # dropout seed in SMEM
            # batch innermost: pe's block index repeats across the inner batch
            # loop, so its re-DMA is skipped (pe stays VMEM resident).
            grid=(n_r, B),
            in_specs=[
                pl.BlockSpec((None, TR, C), lambda t, b, seed: (b, t, 0)),  # x
                pl.BlockSpec((TR, C), lambda t, b, seed: (t, 0)),           # pe
            ],
            out_specs=pl.BlockSpec((None, TR, C), lambda t, b, seed: (b, t, 0)),
        ),
        compiler_params=pltpu.CompilerParams(
            dimension_semantics=("parallel", "parallel"),
            # x/out/pe double-buffered (~6 blocks of <= ~2 MiB) + temporaries;
            # 32 MiB clears v5e's 16 MiB default scoped limit and fits all gens.
            vmem_limit_bytes=32 << 20,
        ),
        cost_estimate=cost,
        **extra,
    )(seed_arr, x3, pe2)

    return out3.reshape(B, S, D)


if __name__ == "__main__":
    # Shapes consistent with the module's forward: (batch, seq_len, d_model).
    B, S, D = 2, 8, 32
    p_drop = 0.1

    key = jax.random.PRNGKey(0)
    x = jax.random.normal(key, (B, S, D), dtype=jnp.float32)
    pe_table = make_pe_table(d_model=D, max_len=100)
    ref = x + pe_table[None, :S, :]

    # Eval-mode forward (dropout is identity) — deterministic.
    out = positional_encoding(x, pe_table, p=p_drop, train=False)
    out = jax.block_until_ready(out)
    assert out.shape == (B, S, D)
    assert jnp.allclose(out, ref, atol=1e-6), "mismatch vs reference (eval path)"

    # Training (dropout) path.  The portable counter-hash RNG is used here so
    # this smoke test also runs under the CPU / interpret harness; real-TPU
    # callers get the hardware PRNG by default (use_hw_prng=None -> True).
    out_train = positional_encoding(x, pe_table, p=p_drop, train=True,
                                    seed=123, use_hw_prng=False)
    out_train = jax.block_until_ready(out_train)
    scaled_ref = ref * (1.0 / (1.0 - p_drop))
    ok = jnp.all((out_train == 0) | jnp.isclose(out_train, scaled_ref,
                                                atol=1e-5, rtol=1e-5))
    assert bool(ok), "dropout output inconsistent with inverted-dropout semantics"

    print("KERNEL_OK")
</pallas_src>

<mosaic_0001>
module attributes {stable_mosaic.version = 11 : i64} {
  func.func @_pe_kernel(%arg0: i32, %arg1: i32, %arg2: memref<1xi32, #tpu.memory_space<smem>>, %arg3: memref<1x1x256xf32, #tpu.memory_space<vmem>>, %arg4: memref<1x256xf32, #tpu.memory_space<vmem>>, %arg5: memref<1x1x256xf32, #tpu.memory_space<vmem>>) attributes {dimension_semantics = [#tpu.dimension_semantics<parallel>, #tpu.dimension_semantics<parallel>], iteration_bounds = array<i64: 1, 2>, scalar_prefetch = 1 : i64, scratch_operands = 0 : i64, tpu.core_type = #tpu.core_type<tc>, window_params = [{transform_indices = @transform_0, window_bounds = array<i64: 1, 1, 256>}, {transform_indices = @transform_1, window_bounds = array<i64: 1, 256>}, {transform_indices = @transform_2, window_bounds = array<i64: 1, 1, 256>}]} {
    %c0 = arith.constant 0 : index
    %c0_0 = arith.constant 0 : index
    %c0_1 = arith.constant 0 : index
    %0 = vector.load %arg3[%c0, %c0_0, %c0_1] : memref<1x1x256xf32, #tpu.memory_space<vmem>>, vector<1x1x256xf32>
    %1 = vector.shape_cast %0 : vector<1x1x256xf32> to vector<1x256xf32>
    %c0_2 = arith.constant 0 : index
    %c0_3 = arith.constant 0 : index
    %2 = vector.load %arg4[%c0_2, %c0_3] : memref<1x256xf32, #tpu.memory_space<vmem>>, vector<1x256xf32>
    %3 = arith.addf %1, %2 : vector<1x256xf32>
    %c0_4 = arith.constant 0 : index
    %c0_5 = arith.constant 0 : index
    %c0_6 = arith.constant 0 : index
    %4 = vector.load %arg5[%c0_4, %c0_5, %c0_6] : memref<1x1x256xf32, #tpu.memory_space<vmem>>, vector<1x1x256xf32>
    %5 = vector.shape_cast %4 : vector<1x1x256xf32> to vector<1x256xf32>
    %6 = vector.shape_cast %3 : vector<1x256xf32> to vector<1x1x256xf32>
    tpu.vector_store %arg5[%c0_4, %c0_5, %c0_6], %6 {strides = array<i32>} : memref<1x1x256xf32, #tpu.memory_space<vmem>>, vector<1x1x256xf32>,
    return
  }
  func.func @transform_0(%arg0: i32, %arg1: i32, %arg2: memref<1xi32, #tpu.memory_space<smem>>) -> (i32, i32, i32) {
    %c0_i32 = arith.constant 0 : i32
    %c0_i32_0 = arith.constant 0 : i32
    return %arg1, %arg0, %c0_i32 : i32, i32, i32
  }
  func.func @transform_1(%arg0: i32, %arg1: i32, %arg2: memref<1xi32, #tpu.memory_space<smem>>) -> (i32, i32) {
    %c0_i32 = arith.constant 0 : i32
    %c0_i32_0 = arith.constant 0 : i32
    return %arg0, %c0_i32 : i32, i32
  }
  func.func @transform_2(%arg0: i32, %arg1: i32, %arg2: memref<1xi32, #tpu.memory_space<smem>>) -> (i32, i32, i32) {
    %c0_i32 = arith.constant 0 : i32
    %c0_i32_0 = arith.constant 0 : i32
    return %arg1, %arg0, %c0_i32 : i32, i32, i32
  }
}

</mosaic_0001>

<llo_original>
// kernel: tpu_custom_call.1
$region0: #{tpu_custom_call.1}
  #allocation0 [shape = 'u32[]', space=smem, size = 0x4, offset = 0x4, fixed_abs, tag = 'smem constant byte address 0x4 - core index']
  #allocation1 [shape = 'u32[144,128]{1,0:T(1,128)}', space=vmem, size = 0x12000, scoped, tag = 'internal scratch']
  #allocation2 [shape = 's32[1]{0}', space=sflag, size = 0x4, scoped, tag = 'scoped memory for tpu_custom_call.1']
  #allocation3 [shape = 's32[1]{0:T(128)S(6)}', space=smem, size = 0x200, scoped, tag = 'prefetched SMEM operand 0']
  %s0 = inlined_call_operand.<no memory space> [shape: s32[1], index: 0, kind: input, shape index: {}]
  %s1 = inlined_call_operand.hbm [shape: f32[2,1,256], index: 1, kind: input, shape index: {}]
  %s2 = inlined_call_operand.vmem [shape: f32[1,256], index: 2, kind: input, shape index: {}]
  %s3 = inlined_call_operand.hbm [shape: f32[2,1,256], index: 3, kind: output, shape index: {}]
  %s4 = sld [smem:[#allocation0]]
  $region45: #{tpu_custom_call.1} parent=0
    _
  %s6 = ssub.s32 1, %s4
  %s7 = scalar_select 0, %s6, %s4
  %8 = sst [smem:[#allocation3]] %s0
  $region1: #{tpu_custom_call.1} parent=0
    #allocation4 [shape = 'u8[2048]{0}', space=vmem, size = 0x800, scoped, tag = 'input window, operand 1']
    #allocation5 [shape = 's32[2]{0}', space=sflag, size = 0x8, scoped, tag = 'scoped memory for tpu_custom_call.1']
    #allocation6 [shape = 's32[2]{0}', space=sflag, size = 0x8, scoped, tag = 'scoped memory for tpu_custom_call.1']
    #allocation7 [shape = 'u8[2048]{0}', space=vmem, size = 0x800, scoped, tag = 'output window, operand 0']
    %9 = vsyncpa [#allocation5], 0
    %s10 = scalar_lea.sflag [#allocation5], 1
    %11 = vsyncpa %s10, 0
    %12 = vsyncpa [#allocation6], 0
    %s13 = scalar_lea.sflag [#allocation6], 1
    %14 = vsyncpa %s13, 0
    loop: start=0, step=1, limit=4
    $region2: #{tpu_custom_call.1} parent=1 // loop_pre_header
      _
    $region3: #{tpu_custom_call.1} parent=1 // loop_header
      %s16 = sphi 0, %s20
      %p17 = scmp.ge.s32.totalorder %s16, 4
      %s23 = sphi 0, %s35
      %s24 = sphi 0, %s31
      %s25 = sphi 0, %s23
      %s26 = sphi 0, %s24
      %s27 = sphi 0, %s25
      %s28 = sphi 0, %s26
      %s40 = sphi 0, %s42
      %s43 = sphi 0, %s40
      %s44 = sphi 0, %s43
      %s60 = sphi 0, %s44
      %s66 = sphi 0, %s68
      %s69 = sphi 0, %s66
      %s70 = sphi 0, %s69
      %s86 = sphi 0, %s70
      %s94 = sphi 0, %s96
      %s97 = sphi 0, %s94
      %s98 = sphi 0, %s97
      %s114 = sphi 0, %s98
    $region4: #{tpu_custom_call.1} parent=1 // loop_header_branch
      %19 = sbr.rel (%p17) target = $region8
    $region5: #{tpu_custom_call.1} parent=1 // loop_body
      %s21 = ssub.s32 %s16, 1
      %s22 = ssub.s32 %s16, 2
      %s29 = sadd.s32 1, %s24
      %p30 = scmp.ge.s32.totalorder %s29, 2
      %s31 = scalar_select %p30, 0, %s29
      %s32 = sadd.s32 1, %s23
      %s33 = scalar_select %p30, %s32, %s23
      %p34 = scmp.ge.s32.totalorder %s33, 1
      %s35 = scalar_select %p34, 0, %s33
      %s36 = ssub.s32 %s24, %s31
      %s37 = ssub.s32 %s23, %s35
      %s38 = sor.u32 %s36, %s37
      %p39 = scmp.eq.s32.totalorder %s38, 0
      %s41 = sadd.s32 %s40, 1
      %s42 = scalar_select %p39, %s40, %s41
      %p45 = pneg %p39
      %p46 = scmp.eq.s32.totalorder %s16, 1
      %p47 = por %p45, %p46
      %p48 = scmp.ne.s32.totalorder %s40, %s43
      %p49 = scmp.eq.s32.totalorder %s16, 0
      %p50 = por %p48, %p49
      %p51 = scmp.ne.s32.totalorder %s40, %s43
      %p52 = scmp.eq.s32.totalorder %s21, 1
      %p53 = por %p51, %p52
      %p54 = scmp.ne.s32.totalorder %s43, %s44
      %p55 = scmp.eq.s32.totalorder %s21, 0
      %p56 = por %p54, %p55
      %p57 = scmp.ne.s32.totalorder %s43, %s44
      %p58 = scmp.eq.s32.totalorder %s22, 1
      %p59 = por %p57, %p58
      %p61 = scmp.ne.s32.totalorder %s44, %s60
      %p62 = scmp.eq.s32.totalorder %s22, 0
      %p63 = por %p61, %p62
      %s64 = ssub.s32 %s23, %s35
      %p65 = scmp.eq.s32.totalorder %s64, 0
      %s67 = sadd.s32 %s66, 1
      %s68 = scalar_select %p65, %s66, %s67
      %p71 = pneg %p65
      %p72 = scmp.eq.s32.totalorder %s16, 1
      %p73 = por %p71, %p72
      %p74 = scmp.ne.s32.totalorder %s66, %s69
      %p75 = scmp.eq.s32.totalorder %s16, 0
      %p76 = por %p74, %p75
      %p77 = scmp.ne.s32.totalorder %s66, %s69
      %p78 = scmp.eq.s32.totalorder %s21, 1
      %p79 = por %p77, %p78
      %p80 = scmp.ne.s32.totalorder %s69, %s70
      %p81 = scmp.eq.s32.totalorder %s21, 0
      %p82 = por %p80, %p81
      %p83 = scmp.ne.s32.totalorder %s69, %s70
      %p84 = scmp.eq.s32.totalorder %s22, 1
      %p85 = por %p83, %p84
      %p87 = scmp.ne.s32.totalorder %s70, %s86
      %p88 = scmp.eq.s32.totalorder %s22, 0
      %p89 = por %p87, %p88
      %s90 = ssub.s32 %s24, %s31
      %s91 = ssub.s32 %s23, %s35
      %s92 = sor.u32 %s90, %s91
      %p93 = scmp.eq.s32.totalorder %s92, 0
      %s95 = sadd.s32 %s94, 1
      %s96 = scalar_select %p93, %s94, %s95
      %p99 = pneg %p93
      %p100 = scmp.eq.s32.totalorder %s16, 1
      %p101 = por %p99, %p100
      %p102 = scmp.ne.s32.totalorder %s94, %s97
      %p103 = scmp.eq.s32.totalorder %s16, 0
      %p104 = por %p102, %p103
      %p105 = scmp.ne.s32.totalorder %s94, %s97
      %p106 = scmp.eq.s32.totalorder %s21, 1
      %p107 = por %p105, %p106
      %p108 = scmp.ne.s32.totalorder %s97, %s98
      %p109 = scmp.eq.s32.totalorder %s21, 0
      %p110 = por %p108, %p109
      %p111 = scmp.ne.s32.totalorder %s97, %s98
      %p112 = scmp.eq.s32.totalorder %s22, 1
      %p113 = por %p111, %p112
      %p115 = scmp.ne.s32.totalorder %s98, %s114
      %p116 = scmp.eq.s32.totalorder %s22, 0
      %p117 = por %p115, %p116
      %p118 = scmp.le.s32.totalorder 1, %s16
      %p119 = scmp.lt.s32.totalorder %s16, 3
      %p120 = pnand %p118, %p119
      %p121 = pneg %p120
      // Predicated region
      $region9: #{tpu_custom_call.1} parent=5 // pred_check
        _
      $region10: #{tpu_custom_call.1} parent=5 // pred_check_branch
        %123 = sbr.rel (%p120) target = $region12
      $region11: #{tpu_custom_call.1} parent=5 // pred_region
        %s124 = ssub.s32 %s16, 1
        // Predicated region
        $region13: #{tpu_custom_call.1} parent=11 // pred_check
          %p125 = pneg %p82
        $region14: #{tpu_custom_call.1} parent=11 // pred_check_branch
          %127 = sbr.rel (%p125) target = $region16
        $region15: #{tpu_custom_call.1} parent=11 // pred_region
          %p128 = scmp.lt.s32.totalorder %s25, 0
          %s129 = scalar_select %p128, %s25, 0
          %s130 = smul.addr %s129, 2
          %s131 = scalar_lea.vmem %s2, %s130
        $region16: #{tpu_custom_call.1} parent=11 // pred_fallthru
          _
      $region12: #{tpu_custom_call.1} parent=5 // pred_fallthru
        _
      %p132 = scmp.lt.s32.totalorder %s16, 2
      // Predicated region
      $region17: #{tpu_custom_call.1} parent=5 // pred_check
        %p133 = pneg %p132
      $region18: #{tpu_custom_call.1} parent=5 // pred_check_branch
        %135 = sbr.rel (%p133) target = $region20
      $region19: #{tpu_custom_call.1} parent=5 // pred_region
        // Predicated region
        $region21: #{tpu_custom_call.1} parent=19 // pred_check
          %p136 = pneg %p50
        $region22: #{tpu_custom_call.1} parent=19 // pred_check_branch
          %138 = sbr.rel (%p136) target = $region24
        $region23: #{tpu_custom_call.1} parent=19 // pred_region
          %s139 = sand.u32 %s40, 1
          %s140 = scalar_lea.sflag [#allocation5], %s139
          %s141 = sand.u32 %s40, 1
          %s142 = smul.addr %s141, 2
          %s143 = scalar_lea.vmem [#allocation4], %s142
          %s145 = ssub.s32 32, 32
          %146 = vsyncadd %s140, %s145
          %s147 = smul.addr %s23, 2
          %s148 = smul.addr %s24, 2
          %s149 = sadd.s32 %s147, %s148
          %s150 = smul.addr %s149, 16
          %s151 = scalar_lea.hbm %s1, %s150
          %s153 = sshll.u32 %s143, 4
          %s154 = int_to_ptr.vmem [resolvable:$true] %s153
          %156 = dma.hbm_to_vmem [thread:$0]  %s151, 32, %s154, %s140
        $region24: #{tpu_custom_call.1} parent=19 // pred_fallthru
          _
      $region20: #{tpu_custom_call.1} parent=5 // pred_fallthru
        _
      %p157 = scmp.le.s32.totalorder 1, %s16
      %p158 = scmp.lt.s32.totalorder %s16, 3
      %p159 = pnand %p157, %p158
      %p160 = pneg %p159
      // Predicated region
      $region25: #{tpu_custom_call.1} parent=5 // pred_check
        _
      $region26: #{tpu_custom_call.1} parent=5 // pred_check_branch
        %162 = sbr.rel (%p159) target = $region28
      $region27: #{tpu_custom_call.1} parent=5 // pred_region
        %s163 = ssub.s32 %s16, 1
        %s164 = sand.u32 %s43, 1
        %s165 = scalar_lea.sflag [#allocation5], %s164
        %s166 = sand.u32 %s43, 1
        %s167 = smul.addr %s166, 2
        %s168 = scalar_lea.vmem [#allocation4], %s167
        // Predicated region
        $region29: #{tpu_custom_call.1} parent=27 // pred_check
          %p169 = pneg %p56
        $region30: #{tpu_custom_call.1} parent=27 // pred_check_branch
          %171 = sbr.rel (%p169) target = $region32
        $region31: #{tpu_custom_call.1} parent=27 // pred_region
          %172 = dma.done %s165, 32
        $region32: #{tpu_custom_call.1} parent=27 // pred_fallthru
          _
        %s173 = sand.u32 %s43, 1
        %s174 = scalar_lea.sflag [#allocation5], %s173
        %s175 = sand.u32 %s43, 1
        %s176 = smul.addr %s175, 2
        %s177 = scalar_lea.vmem [#allocation4], %s176
        %p178 = pneg %p56
        %p179 = pneg %p53
        %p180 = scmp.lt.s32.totalorder %s25, 0
        %s181 = scalar_select %p180, %s25, 0
        %s182 = smul.addr %s181, 2
        %s183 = scalar_lea.vmem %s2, %s182
        %p184 = pneg %p82
        %p185 = pneg %p79
        %p186 = pneg %p110
        %p187 = pneg %p107
        %s188 = sand.u32 %s97, 1
        %s189 = scalar_lea.sflag [#allocation6], %s188
        %s190 = sand.u32 %s97, 1
        %s191 = smul.addr %s190, 2
        %s192 = scalar_lea.vmem [#allocation7], %s191
        %p193 = scmp.lt.s32.totalorder %s25, 0
        %s194 = scalar_select %p193, %s25, 0
        %s195 = smul.addr %s194, 2
        %s196 = scalar_lea.vmem %s2, %s195
        %v197 = vld [vmem:[%s168] sm:$0x3]
        %v198 = vld [vmem:[%s196] sm:$0x3]
        %v199 = vadd.f32 %v197, %v198
        %v200 = vlaneseq
        %vm201 = vcmp.ge.s32.totalorder %v200, 0
        %vm202 = vcmp.lt.s32.totalorder %v200, 256
        %vm203 = vmand %vm201, %vm202
        %204 = vst.msk [vmem:[%s192] sm:$0x3] %vm203, %v199
        %s205 = sand.u32 %s97, 1
        %s206 = scalar_lea.sflag [#allocation6], %s205
        %s207 = sand.u32 %s97, 1
        %s208 = smul.addr %s207, 2
        %s209 = scalar_lea.vmem [#allocation7], %s208
        // Predicated region
        $region33: #{tpu_custom_call.1} parent=27 // pred_check
          %p210 = pneg %p107
        $region34: #{tpu_custom_call.1} parent=27 // pred_check_branch
          %212 = sbr.rel (%p210) target = $region36
        $region35: #{tpu_custom_call.1} parent=27 // pred_region
          %s214 = ssub.s32 32, 32
          %215 = vsyncadd %s206, %s214
          %s216 = smul.addr %s25, 2
          %s217 = smul.addr %s26, 2
          %s218 = sadd.s32 %s216, %s217
          %s219 = smul.addr %s218, 16
          %s220 = scalar_lea.hbm %s3, %s219
          %s222 = sshll.u32 %s209, 4
          %s223 = int_to_ptr.vmem [resolvable:$true] %s222
          %225 = dma.vmem_to_hbm [thread:$0]  %s223, 32, %s220, %s206
        $region36: #{tpu_custom_call.1} parent=27 // pred_fallthru
          _
      $region28: #{tpu_custom_call.1} parent=5 // pred_fallthru
        _
      %p226 = scmp.le.s32.totalorder 2, %s16
      // Predicated region
      $region37: #{tpu_custom_call.1} parent=5 // pred_check
        %p227 = pneg %p226
      $region38: #{tpu_custom_call.1} parent=5 // pred_check_branch
        %229 = sbr.rel (%p227) target = $region40
      $region39: #{tpu_custom_call.1} parent=5 // pred_region
        %s230 = ssub.s32 %s16, 2
        // Predicated region
        $region41: #{tpu_custom_call.1} parent=39 // pred_check
          %p231 = pneg %p113
        $region42: #{tpu_custom_call.1} parent=39 // pred_check_branch
          %233 = sbr.rel (%p231) target = $region44
        $region43: #{tpu_custom_call.1} parent=39 // pred_region
          %s234 = sand.u32 %s98, 1
          %s235 = scalar_lea.sflag [#allocation6], %s234
          %s236 = sand.u32 %s98, 1
          %s237 = smul.addr %s236, 2
          %s238 = scalar_lea.vmem [#allocation7], %s237
          %239 = dma.done %s235, 32
        $region44: #{tpu_custom_call.1} parent=39 // pred_fallthru
          _
      $region40: #{tpu_custom_call.1} parent=5 // pred_fallthru
        _
    $region6: #{tpu_custom_call.1} parent=1 // loop_footer
      %s20 = sadd.s32 1, %s16
    $region7: #{tpu_custom_call.1} parent=1 // loop_footer_branch
      %15 = sbr.rel target = $region3
    $region8: #{tpu_custom_call.1} parent=1 // loop_exit
      _
    %240 = vsyncpa [#allocation5], 1
    %s241 = scalar_lea.sflag [#allocation5], 1
    %242 = vsyncpa %s241, 1
    %243 = vsyncpa [#allocation6], 1
    %s244 = scalar_lea.sflag [#allocation6], 1
    %245 = vsyncpa %s244, 1

</llo_original>
